<compile_context>
chip_gen: v7x
topology: tpu7x:2x2x1
jax: 0.10.0
libtpu: 0.0.40
codegen_flags: <defaults>
</compile_context>

<pallas_src>
import jax
import jax.numpy as jnp
from jax.experimental import pallas as pl
from jax.experimental.pallas import tpu as pltpu

LANE = 128
SUBLANE = 8
NEG_INF = -1e30  # padding bias for the unused output columns


def _round_up(n, m):
    return ((n + m - 1) // m) * m


# ----------------------------- fused Pallas kernel ---------------------------

def make_fcnet_kernel(n_hidden):
    """Fused forward: n_hidden x (Linear + PReLU) -> Linear -> log_softmax.

    Ref order:
      x       (TM, K)            f32   VMEM row tile
      wh      (L, K, K)          bf16  VMEM, stacked hidden weights (in, out)
      bh      (L, 1, K)          f32   VMEM, stacked hidden biases
      wo      (K, Npad)          bf16  VMEM, zero-padded output weight
      bo      (1, Npad)          f32   VMEM, -1e30-padded output bias
      alpha   (1,)               f32   SMEM, shared PReLU slope
      out     (TM, Npad)         f32   VMEM, lane-dense log_softmax
    """

    def kernel(x_ref, wh_ref, bh_ref, wo_ref, bo_ref, alpha_ref, out_ref):
        alpha = alpha_ref[0]                      # shared PReLU slope (SMEM scalar)

        h = x_ref[...]                            # (TM, K) f32
        for i in range(n_hidden):                 # static unroll; ref[i] is a free view
            w = wh_ref[i]                         # (K, K)  bf16
            b = bh_ref[i]                         # (1, K)  f32
            h = jnp.dot(h.astype(jnp.bfloat16), w,
                        preferred_element_type=jnp.float32) + b
            h = jnp.where(h > 0, h, alpha * h)    # PReLU (shared alpha), f32 on VPU
            # TODO(synk): nn.Dropout(p=0.5) applied as identity (eval mode).

        logits = jnp.dot(h.astype(jnp.bfloat16), wo_ref[...],
                         preferred_element_type=jnp.float32) + bo_ref[...]

        # Numerically-stable log_softmax over dim 1.  Padded columns carry a
        # -1e30 bias, so they never win the max and contribute exp(.) == 0.
        mx = jnp.max(logits, axis=1, keepdims=True)
        z = logits - mx
        lse = jnp.log(jnp.sum(jnp.exp(z), axis=1, keepdims=True))
        out_ref[...] = z - lse                    # lane-dense unmasked store

    return kernel


# ----------------------------- pallas_call wrapper ---------------------------

def fcnet_forward(params, x, *, row_tile=128):
    wh = params["hidden_w"]            # (L, K, K)  bf16
    bh = params["hidden_b"]            # (L, 1, K)  f32
    wo = params["out_w"]               # (K, Npad)  bf16
    bo = params["out_b"]               # (1, Npad)  f32
    alpha = params["prelu_alpha"]      # (1,)       f32
    output_size = params["output_size"]

    n_hidden, k_dim = wh.shape[0], wh.shape[1]
    n_pad = wo.shape[1]

    # Pad the batch so rows fill whole sublane groups (>=8); for big batches
    # tile rows at 128 so the grid can pipeline / shard across TensorCores.
    batch = x.shape[0]
    if batch <= row_tile:
        b_pad = max(SUBLANE, _round_up(batch, SUBLANE))
        tm = b_pad
    else:
        b_pad = _round_up(batch, row_tile)
        tm = row_tile
    if b_pad != batch:
        x = jnp.pad(x, ((0, b_pad - batch), (0, 0)))

    grid = (b_pad // tm,)

    out = pl.pallas_call(
        make_fcnet_kernel(n_hidden),
        out_shape=jax.ShapeDtypeStruct((b_pad, n_pad), jnp.float32),
        grid=grid,
        in_specs=[
            pl.BlockSpec((tm, k_dim), lambda i: (i, 0)),                 # x rows
            pl.BlockSpec((n_hidden, k_dim, k_dim), lambda i: (0, 0, 0)), # wh (resident)
            pl.BlockSpec((n_hidden, 1, k_dim), lambda i: (0, 0, 0)),     # bh (resident)
            pl.BlockSpec((k_dim, n_pad), lambda i: (0, 0)),              # wo (resident)
            pl.BlockSpec((1, n_pad), lambda i: (0, 0)),                  # bo (resident)
            pl.BlockSpec((1,), lambda i: (0,),
                         memory_space=pltpu.MemorySpace.SMEM),           # alpha scalar
        ],
        out_specs=pl.BlockSpec((tm, n_pad), lambda i: (i, 0)),
        compiler_params=pltpu.CompilerParams(
            dimension_semantics=("parallel",)),
    )(x, wh, bh, wo, bo, alpha)

    return out[:batch, :output_size]


# ----------------------------- parameters ------------------------------------

def _xavier_uniform(key, fan_in, fan_out):
    bound = (6.0 / (fan_in + fan_out)) ** 0.5
    # stored transposed: (in, out) so the kernel computes x @ W
    return jax.random.uniform(key, (fan_in, fan_out), jnp.float32, -bound, bound)


def init_params(key, input_size, hidden_layers, output_size):
    sizes = [input_size] + list(hidden_layers)
    # Stacked-weight fast path assumes uniform widths (true for this config).
    assert len(set(sizes)) == 1, "stacked hidden weights require uniform widths"
    k_dim = sizes[0]
    n_layers = len(hidden_layers)
    n_pad = _round_up(output_size, LANE)

    keys = jax.random.split(key, 2 * n_layers + 2)
    ki = 0
    ws, bs = [], []
    for fin, fout in zip(sizes[:-1], sizes[1:]):
        w = _xavier_uniform(keys[ki], fin, fout); ki += 1
        bnd = 1.0 / (fin ** 0.5)                 # PyTorch default Linear bias init
        b = jax.random.uniform(keys[ki], (1, fout), jnp.float32, -bnd, bnd); ki += 1
        ws.append(w); bs.append(b)

    wo = _xavier_uniform(keys[ki], sizes[-1], output_size); ki += 1
    bnd = 1.0 / (sizes[-1] ** 0.5)
    bo = jax.random.uniform(keys[ki], (1, output_size), jnp.float32, -bnd, bnd); ki += 1

    # Kernel-ready packing: bf16 stacked hidden weights, f32 stacked biases,
    # lane-padded output weight (zeros) and bias (-1e30 so padding is inert).
    hidden_w = jnp.stack(ws).astype(jnp.bfloat16)              # (L, K, K)
    hidden_b = jnp.stack(bs)                                   # (L, 1, K) f32
    out_w = jnp.zeros((k_dim, n_pad), jnp.float32).at[:, :output_size].set(wo)
    out_w = out_w.astype(jnp.bfloat16)                         # (K, Npad)
    out_b = jnp.full((1, n_pad), NEG_INF, jnp.float32).at[:, :output_size].set(bo)
    alpha = jnp.full((1,), 0.25, jnp.float32)                  # nn.PReLU() default

    return {
        "hidden_w": hidden_w, "hidden_b": hidden_b,
        "out_w": out_w, "out_b": out_b,
        "prelu_alpha": alpha, "output_size": output_size,
    }


# ----------------------------- pure-JAX reference -----------------------------

def fcnet_reference(params, x):
    """Same math as the kernel (bf16 weights, f32 accumulate/elementwise)."""
    alpha = params["prelu_alpha"][0]
    h = x
    wh, bh = params["hidden_w"], params["hidden_b"]
    for i in range(wh.shape[0]):
        h = jnp.dot(h.astype(jnp.bfloat16), wh[i],
                    preferred_element_type=jnp.float32) + bh[i]
        h = jnp.where(h > 0, h, alpha * h)
    logits = jnp.dot(h.astype(jnp.bfloat16), params["out_w"],
                     preferred_element_type=jnp.float32) + params["out_b"]
    return jax.nn.log_softmax(logits, axis=1)[:, :params["output_size"]]


# ----------------------------- main -------------------------------------------

if __name__ == "__main__":
    input_size = 128
    hidden_layers = [128, 128]     # lane-dense widths (multiples of 128)
    output_size = 10
    batch = 2                      # tiny logical batch; wrapper pads rows to 8

    key = jax.random.PRNGKey(0)
    kx, kp = jax.random.split(key)
    x = jax.random.normal(kx, (batch, input_size), jnp.float32)
    params = init_params(kp, input_size, hidden_layers, output_size)

    out = jax.block_until_ready(fcnet_forward(params, x))
    ref = fcnet_reference(params, x)

    assert out.shape == (batch, output_size)
    # log_softmax rows must exponentiate-sum to 1
    assert bool(jnp.allclose(jnp.sum(jnp.exp(out), axis=1), 1.0, atol=1e-4))
    # match the pure-JAX reference of the PyTorch module semantics
    assert bool(jnp.allclose(out, ref, atol=1e-4, rtol=1e-4))
    print("KERNEL_OK")
</pallas_src>

<mosaic_0001>
module attributes {stable_mosaic.version = 11 : i64} {
  func.func @kernel(%arg0: i32, %arg1: memref<8x128xf32, #tpu.memory_space<vmem>>, %arg2: memref<2x128x128xbf16, #tpu.memory_space<vmem>>, %arg3: memref<2x1x128xf32, #tpu.memory_space<vmem>>, %arg4: memref<128x128xbf16, #tpu.memory_space<vmem>>, %arg5: memref<1x128xf32, #tpu.memory_space<vmem>>, %arg6: memref<1xf32, #tpu.memory_space<smem>>, %arg7: memref<8x128xf32, #tpu.memory_space<vmem>>) attributes {dimension_semantics = [#tpu.dimension_semantics<parallel>], iteration_bounds = array<i64: 1>, scalar_prefetch = 0 : i64, scratch_operands = 0 : i64, tpu.core_type = #tpu.core_type<tc>, window_params = [{transform_indices = @transform_0, window_bounds = array<i64: 8, 128>}, {pipeline_mode = #tpu.pipeline_mode<synchronous>, transform_indices = @transform_1, window_bounds = array<i64: 2, 128, 128>}, {pipeline_mode = #tpu.pipeline_mode<synchronous>, transform_indices = @transform_2, window_bounds = array<i64: 2, 1, 128>}, {pipeline_mode = #tpu.pipeline_mode<synchronous>, transform_indices = @transform_3, window_bounds = array<i64: 128, 128>}, {pipeline_mode = #tpu.pipeline_mode<synchronous>, transform_indices = @transform_4, window_bounds = array<i64: 1, 128>}, {transform_indices = @transform_5, window_bounds = array<i64: 1>}, {transform_indices = @transform_6, window_bounds = array<i64: 8, 128>}]} {
    %c0 = arith.constant 0 : index
    %0 = memref.load %arg6[%c0] : memref<1xf32, #tpu.memory_space<smem>>
    %c0_0 = arith.constant 0 : index
    %c0_1 = arith.constant 0 : index
    %1 = vector.load %arg1[%c0_0, %c0_1] : memref<8x128xf32, #tpu.memory_space<vmem>>, vector<8x128xf32>
    %c0_2 = arith.constant 0 : index
    %c0_3 = arith.constant 0 : index
    %c0_4 = arith.constant 0 : index
    %2 = vector.load %arg2[%c0_2, %c0_3, %c0_4] : memref<2x128x128xbf16, #tpu.memory_space<vmem>>, vector<1x128x128xbf16>
    %3 = vector.shape_cast %2 : vector<1x128x128xbf16> to vector<128x128xbf16>
    %c0_5 = arith.constant 0 : index
    %c0_6 = arith.constant 0 : index
    %c0_7 = arith.constant 0 : index
    %4 = vector.load %arg3[%c0_5, %c0_6, %c0_7] : memref<2x1x128xf32, #tpu.memory_space<vmem>>, vector<1x1x128xf32>
    %5 = vector.shape_cast %4 : vector<1x1x128xf32> to vector<1x128xf32>
    %6 = arith.truncf %1 : vector<8x128xf32> to vector<8x128xbf16>
    %cst = arith.constant dense<0.000000e+00> : vector<8x128xf32>
    %7 = tpu.matmul %6, %3, %cst {dimension_numbers = #tpu.dot_dimension_numbers<[1], [0], [0], [1], [0, 0, 1, 1], [], []>} : vector<8x128xbf16>, vector<128x128xbf16>, vector<8x128xf32> -> vector<8x128xf32>
    %8 = vector.broadcast %5 : vector<1x128xf32> to vector<8x128xf32>
    %9 = arith.addf %7, %8 : vector<8x128xf32>
    %cst_8 = arith.constant 0.000000e+00 : f32
    %10 = vector.broadcast %cst_8 : f32 to vector<8x128xf32>
    %11 = arith.cmpf ogt, %9, %10 : vector<8x128xf32>
    %12 = vector.broadcast %0 : f32 to vector<8x128xf32>
    %13 = arith.mulf %12, %9 : vector<8x128xf32>
    %14 = arith.select %11, %9, %13 : vector<8x128xi1>, vector<8x128xf32>
    %c1 = arith.constant 1 : index
    %c0_9 = arith.constant 0 : index
    %c0_10 = arith.constant 0 : index
    %15 = vector.load %arg2[%c1, %c0_9, %c0_10] : memref<2x128x128xbf16, #tpu.memory_space<vmem>>, vector<1x128x128xbf16>
    %16 = vector.shape_cast %15 : vector<1x128x128xbf16> to vector<128x128xbf16>
    %c1_11 = arith.constant 1 : index
    %c0_12 = arith.constant 0 : index
    %c0_13 = arith.constant 0 : index
    %17 = vector.load %arg3[%c1_11, %c0_12, %c0_13] : memref<2x1x128xf32, #tpu.memory_space<vmem>>, vector<1x1x128xf32>
    %18 = vector.shape_cast %17 : vector<1x1x128xf32> to vector<1x128xf32>
    %19 = arith.truncf %14 : vector<8x128xf32> to vector<8x128xbf16>
    %cst_14 = arith.constant dense<0.000000e+00> : vector<8x128xf32>
    %20 = tpu.matmul %19, %16, %cst_14 {dimension_numbers = #tpu.dot_dimension_numbers<[1], [0], [0], [1], [0, 0, 1, 1], [], []>} : vector<8x128xbf16>, vector<128x128xbf16>, vector<8x128xf32> -> vector<8x128xf32>
    %21 = vector.broadcast %18 : vector<1x128xf32> to vector<8x128xf32>
    %22 = arith.addf %20, %21 : vector<8x128xf32>
    %cst_15 = arith.constant 0.000000e+00 : f32
    %23 = vector.broadcast %cst_15 : f32 to vector<8x128xf32>
    %24 = arith.cmpf ogt, %22, %23 : vector<8x128xf32>
    %25 = vector.broadcast %0 : f32 to vector<8x128xf32>
    %26 = arith.mulf %25, %22 : vector<8x128xf32>
    %27 = arith.select %24, %22, %26 : vector<8x128xi1>, vector<8x128xf32>
    %28 = arith.truncf %27 : vector<8x128xf32> to vector<8x128xbf16>
    %c0_16 = arith.constant 0 : index
    %c0_17 = arith.constant 0 : index
    %29 = vector.load %arg4[%c0_16, %c0_17] : memref<128x128xbf16, #tpu.memory_space<vmem>>, vector<128x128xbf16>
    %cst_18 = arith.constant dense<0.000000e+00> : vector<8x128xf32>
    %30 = tpu.matmul %28, %29, %cst_18 {dimension_numbers = #tpu.dot_dimension_numbers<[1], [0], [0], [1], [0, 0, 1, 1], [], []>} : vector<8x128xbf16>, vector<128x128xbf16>, vector<8x128xf32> -> vector<8x128xf32>
    %c0_19 = arith.constant 0 : index
    %c0_20 = arith.constant 0 : index
    %31 = vector.load %arg5[%c0_19, %c0_20] : memref<1x128xf32, #tpu.memory_space<vmem>>, vector<1x128xf32>
    %32 = vector.broadcast %31 : vector<1x128xf32> to vector<8x128xf32>
    %33 = arith.addf %30, %32 : vector<8x128xf32>
    %cst_21 = arith.constant dense<0xFF800000> : vector<8xf32>
    %34 = vector.multi_reduction <maximumf>, %33, %cst_21 [1] : vector<8x128xf32> to vector<8xf32>
    %35 = vector.shape_cast %34 : vector<8xf32> to vector<8x1xf32>
    %36 = vector.broadcast %35 : vector<8x1xf32> to vector<8x128xf32>
    %37 = arith.subf %33, %36 : vector<8x128xf32>
    %38 = math.exp %37 : vector<8x128xf32>
    %cst_22 = arith.constant dense<0.000000e+00> : vector<8xf32>
    %39 = vector.multi_reduction <add>, %38, %cst_22 [1] : vector<8x128xf32> to vector<8xf32>
    %40 = vector.shape_cast %39 : vector<8xf32> to vector<8x1xf32>
    %41 = math.log %40 : vector<8x1xf32>
    %42 = vector.broadcast %41 : vector<8x1xf32> to vector<8x128xf32>
    %43 = arith.subf %37, %42 : vector<8x128xf32>
    %c0_23 = arith.constant 0 : index
    %c0_24 = arith.constant 0 : index
    %44 = vector.load %arg7[%c0_23, %c0_24] : memref<8x128xf32, #tpu.memory_space<vmem>>, vector<8x128xf32>
    tpu.vector_store %arg7[%c0_23, %c0_24], %43 {strides = array<i32>} : memref<8x128xf32, #tpu.memory_space<vmem>>, vector<8x128xf32>,
    return
  }
  func.func @transform_0(%arg0: i32) -> (i32, i32) {
    %c0_i32 = arith.constant 0 : i32
    %c0_i32_0 = arith.constant 0 : i32
    return %arg0, %c0_i32 : i32, i32
  }
  func.func @transform_1(%arg0: i32) -> (i32, i32, i32) {
    %c0_i32 = arith.constant 0 : i32
    %c0_i32_0 = arith.constant 0 : i32
    %c0_i32_1 = arith.constant 0 : i32
    %c0_i32_2 = arith.constant 0 : i32
    return %c0_i32, %c0_i32_0, %c0_i32_1 : i32, i32, i32
  }
  func.func @transform_2(%arg0: i32) -> (i32, i32, i32) {
    %c0_i32 = arith.constant 0 : i32
    %c0_i32_0 = arith.constant 0 : i32
    %c0_i32_1 = arith.constant 0 : i32
    %c0_i32_2 = arith.constant 0 : i32
    return %c0_i32, %c0_i32_0, %c0_i32_1 : i32, i32, i32
  }
  func.func @transform_3(%arg0: i32) -> (i32, i32) {
    %c0_i32 = arith.constant 0 : i32
    %c0_i32_0 = arith.constant 0 : i32
    %c0_i32_1 = arith.constant 0 : i32
    return %c0_i32, %c0_i32_0 : i32, i32
  }
  func.func @transform_4(%arg0: i32) -> (i32, i32) {
    %c0_i32 = arith.constant 0 : i32
    %c0_i32_0 = arith.constant 0 : i32
    %c0_i32_1 = arith.constant 0 : i32
    return %c0_i32, %c0_i32_0 : i32, i32
  }
  func.func @transform_5(%arg0: i32) -> i32 {
    %c0_i32 = arith.constant 0 : i32
    %c0_i32_0 = arith.constant 0 : i32
    return %c0_i32 : i32
  }
  func.func @transform_6(%arg0: i32) -> (i32, i32) {
    %c0_i32 = arith.constant 0 : i32
    %c0_i32_0 = arith.constant 0 : i32
    return %arg0, %c0_i32 : i32, i32
  }
}

</mosaic_0001>

<llo_original>
// kernel: tpu_custom_call.1
$region0: #{tpu_custom_call.1}
  #allocation0 [shape = 'u32[]', space=smem, size = 0x4, offset = 0x4, fixed_abs, tag = 'smem constant byte address 0x4 - core index']
  #allocation1 [shape = 'u32[144,128]{1,0:T(1,128)}', space=vmem, size = 0x12000, scoped, tag = 'internal scratch']
  #allocation2 [shape = 'f32[1]{0:T(128)S(6)}', space=smem, size = 0x200, scoped, tag = 'scoped memory for tpu_custom_call.1']
  %s0 = inlined_call_operand.hbm [shape: f32[8,128], index: 0, kind: input, shape index: {}]
  %s1 = inlined_call_operand.hbm [shape: bf16[2,128,128], index: 1, kind: input, shape index: {}]
  %s2 = inlined_call_operand.vmem [shape: f32[2,1,128], index: 2, kind: input, shape index: {}]
  %s3 = inlined_call_operand.hbm [shape: bf16[128,128], index: 3, kind: input, shape index: {}]
  %s4 = inlined_call_operand.vmem [shape: f32[1,128], index: 4, kind: input, shape index: {}]
  %s5 = inlined_call_operand.<no memory space> [shape: f32[1], index: 5, kind: input, shape index: {}]
  %s6 = inlined_call_operand.hbm [shape: f32[8,128], index: 6, kind: output, shape index: {}]
  %s7 = sld [smem:[#allocation0]]
  $region46: #{tpu_custom_call.1} parent=0
    _
  %s9 = ssub.s32 1, %s7
  %s10 = scalar_select 0, %s9, %s7
  %11 = sst [smem:[#allocation2]] %s5
  $region1: #{tpu_custom_call.1} parent=0
    #allocation3 [shape = 'u8[4096]{0}', space=vmem, size = 0x1000, scoped, tag = 'input window, operand 0, single buffered']
    #allocation4 [shape = 's32[1]{0}', space=sflag, size = 0x4, scoped, tag = 'scoped memory for tpu_custom_call.1']
    #allocation5 [shape = 's32[1]{0}', space=sflag, size = 0x4, scoped, tag = 'scoped memory for tpu_custom_call.1']
    #allocation6 [shape = 'u8[65536]{0}', space=vmem, size = 0x10000, scoped, tag = 'input window, operand 1, single buffered']
    #allocation7 [shape = 's32[1]{0}', space=sflag, size = 0x4, scoped, tag = 'scoped memory for tpu_custom_call.1']
    #allocation8 [shape = 'u8[32768]{0}', space=vmem, size = 0x8000, scoped, tag = 'input window, operand 3, single buffered']
    #allocation9 [shape = 'u8[4096]{0}', space=vmem, size = 0x1000, scoped, tag = 'output window, operand 0, single buffered']
    %12 = vsyncpa [#allocation4], 0
    %13 = vsyncpa [#allocation7], 0
    %14 = vsyncpa [#allocation5], 0
    // Predicated region
    $region2: #{tpu_custom_call.1} parent=1 // pred_check
      _
    $region3: #{tpu_custom_call.1} parent=1 // pred_check_branch
      %16 = sbr.rel (0) target = $region5
    $region4: #{tpu_custom_call.1} parent=1 // pred_region
      %s18 = ssub.s32 128, 128
      %19 = vsyncadd [#allocation4], %s18
      %s21 = sshll.u32 [#allocation3], 4
      %s22 = int_to_ptr.vmem [resolvable:$true] %s21
      %24 = dma.hbm_to_vmem [thread:$0]  %s0, 128, %s22, [#allocation4]
    $region5: #{tpu_custom_call.1} parent=1 // pred_fallthru
      _
    // Predicated region
    $region6: #{tpu_custom_call.1} parent=1 // pred_check
      _
    $region7: #{tpu_custom_call.1} parent=1 // pred_check_branch
      %26 = sbr.rel (0) target = $region9
    $region8: #{tpu_custom_call.1} parent=1 // pred_region
      %s28 = ssub.s32 2048, 2048
      %29 = vsyncadd [#allocation7], %s28
      %s30 = sshll.u32 [#allocation6], 4
      %s31 = int_to_ptr.vmem [resolvable:$true] %s30
      %36 = dma.hbm_to_vmem [thread:$0]  %s1, 2048, %s31, [#allocation7], 64, 64, 4
    $region9: #{tpu_custom_call.1} parent=1 // pred_fallthru
      _
    // Predicated region
    $region10: #{tpu_custom_call.1} parent=1 // pred_check
      _
    $region11: #{tpu_custom_call.1} parent=1 // pred_check_branch
      %38 = sbr.rel (0) target = $region13
    $region12: #{tpu_custom_call.1} parent=1 // pred_region
      _
    $region13: #{tpu_custom_call.1} parent=1 // pred_fallthru
      _
    // Predicated region
    $region14: #{tpu_custom_call.1} parent=1 // pred_check
      _
    $region15: #{tpu_custom_call.1} parent=1 // pred_check_branch
      %40 = sbr.rel (0) target = $region17
    $region16: #{tpu_custom_call.1} parent=1 // pred_region
      %s42 = ssub.s32 1024, 1024
      %43 = vsyncadd [#allocation7], %s42
      %s44 = sshll.u32 [#allocation8], 4
      %s45 = int_to_ptr.vmem [resolvable:$true] %s44
      %50 = dma.hbm_to_vmem [thread:$0]  %s3, 1024, %s45, [#allocation7], 64, 64, 4
    $region17: #{tpu_custom_call.1} parent=1 // pred_fallthru
      _
    // Predicated region
    $region18: #{tpu_custom_call.1} parent=1 // pred_check
      _
    $region19: #{tpu_custom_call.1} parent=1 // pred_check_branch
      %52 = sbr.rel (0) target = $region21
    $region20: #{tpu_custom_call.1} parent=1 // pred_region
      _
    $region21: #{tpu_custom_call.1} parent=1 // pred_fallthru
      _
    // Predicated region
    $region22: #{tpu_custom_call.1} parent=1 // pred_check
      _
    $region23: #{tpu_custom_call.1} parent=1 // pred_check_branch
      %54 = sbr.rel (0) target = $region25
    $region24: #{tpu_custom_call.1} parent=1 // pred_region
      _
    $region25: #{tpu_custom_call.1} parent=1 // pred_fallthru
      _
    // Predicated region
    $region26: #{tpu_custom_call.1} parent=1 // pred_check
      _
    $region27: #{tpu_custom_call.1} parent=1 // pred_check_branch
      %56 = sbr.rel (0) target = $region29
    $region28: #{tpu_custom_call.1} parent=1 // pred_region
      %57 = dma.done [#allocation4], 128
    $region29: #{tpu_custom_call.1} parent=1 // pred_fallthru
      _
    // Predicated region
    $region30: #{tpu_custom_call.1} parent=1 // pred_check
      _
    $region31: #{tpu_custom_call.1} parent=1 // pred_check_branch
      %59 = sbr.rel (0) target = $region33
    $region32: #{tpu_custom_call.1} parent=1 // pred_region
      %60 = dma.done [#allocation7], 2048
    $region33: #{tpu_custom_call.1} parent=1 // pred_fallthru
      _
    // Predicated region
    $region34: #{tpu_custom_call.1} parent=1 // pred_check
      _
    $region35: #{tpu_custom_call.1} parent=1 // pred_check_branch
      %62 = sbr.rel (0) target = $region37
    $region36: #{tpu_custom_call.1} parent=1 // pred_region
      %63 = dma.done [#allocation7], 1024
    $region37: #{tpu_custom_call.1} parent=1 // pred_fallthru
      _
    %s65 = sld [smem:[#allocation2]]
    %v66 = vld [vmem:[#allocation3] sm:$0xff]
    %v67 = vld [vmem:[#allocation6] sm:$0xf]
    %v68 = vld [vmem:[#allocation6 + $0x4] sm:$0xf]
    %v69 = vld [vmem:[#allocation6 + $0x8] sm:$0xf]
    %v70 = vld [vmem:[#allocation6 + $0xc] sm:$0xf]
    %v71 = vld [vmem:[#allocation6 + $0x10] sm:$0xf]
    %v72 = vld [vmem:[#allocation6 + $0x14] sm:$0xf]
    %v73 = vld [vmem:[#allocation6 + $0x18] sm:$0xf]
    %v74 = vld [vmem:[#allocation6 + $0x1c] sm:$0xf]
    %v75 = vld [vmem:[#allocation6 + $0x20] sm:$0xf]
    %v76 = vld [vmem:[#allocation6 + $0x24] sm:$0xf]
    %v77 = vld [vmem:[#allocation6 + $0x28] sm:$0xf]
    %v78 = vld [vmem:[#allocation6 + $0x2c] sm:$0xf]
    %v79 = vld [vmem:[#allocation6 + $0x30] sm:$0xf]
    %v80 = vld [vmem:[#allocation6 + $0x34] sm:$0xf]
    %v81 = vld [vmem:[#allocation6 + $0x38] sm:$0xf]
    %v82 = vld [vmem:[#allocation6 + $0x3c] sm:$0xf]
    %v83 = vld [vmem:[%s2] sm:$0x1]
    %v84 = vpack.c.bf16 %v66, %v66
    %v86 = vlaneseq
    %v87 = vshrl.u32 %v86, 7
    %v88 = vsub.s32 0, %v87
    %v89 = vrot.slane %v83, %v88
    %v107 = vunpack.c.l.b16 %v67
    %v108 = vunpack.c.l.b16 %v68
    %v109 = vunpack.c.l.b16 %v69
    %v110 = vunpack.c.l.b16 %v70
    %v111 = vunpack.c.l.b16 %v71
    %v112 = vunpack.c.l.b16 %v72
    %v113 = vunpack.c.l.b16 %v73
    %v114 = vunpack.c.l.b16 %v74
    %v115 = vunpack.c.l.b16 %v75
    %v116 = vunpack.c.l.b16 %v76
    %v117 = vunpack.c.l.b16 %v77
    %v118 = vunpack.c.l.b16 %v78
    %v119 = vunpack.c.l.b16 %v79
    %v120 = vunpack.c.l.b16 %v80
    %v121 = vunpack.c.l.b16 %v81
    %v122 = vunpack.c.l.b16 %v82
    %v123 = vpack.c.b16 %v108, %v107
    %v124 = vpack.c.b16 %v110, %v109
    %v125 = vpack.c.b16 %v112, %v111
    %v126 = vpack.c.b16 %v114, %v113
    %v127 = vpack.c.b16 %v116, %v115
    %v128 = vpack.c.b16 %v118, %v117
    %v129 = vpack.c.b16 %v120, %v119
    %v130 = vpack.c.b16 %v122, %v121
    %139 = vmatprep.subr.bf16.mxu0 0
    %140 = vmatpush1.bf16.msra.mxu0 %v123
    %141 = vmatprep.subr.bf16.mxu0 0
    %142 = vmatpush1.bf16.msra.mxu0 %v124
    %143 = vmatprep.subr.bf16.mxu0 0
    %144 = vmatpush1.bf16.msra.mxu0 %v125
    %145 = vmatprep.subr.bf16.mxu0 0
    %146 = vmatpush1.bf16.msra.mxu0 %v126
    %147 = vmatprep.subr.bf16.mxu0 0
    %148 = vmatpush1.bf16.msra.mxu0 %v127
    %149 = vmatprep.subr.bf16.mxu0 0
    %150 = vmatpush1.bf16.msra.mxu0 %v128
    %151 = vmatprep.subr.bf16.mxu0 0
    %152 = vmatpush1.bf16.msra.mxu0 %v129
    %153 = vmatprep.subr.bf16.mxu0 0
    %154 = vmatpush1.bf16.msra.mxu0 %v130
    %155 = vmatprep.subr.bf16.mxu0 0
    %156 = vmatpush1.bf16.msra.mxu0 0
    %157 = vmatprep.subr.bf16.mxu0 0
    %158 = vmatpush1.bf16.msra.mxu0 0
    %159 = vmatprep.subr.bf16.mxu0 0
    %160 = vmatpush1.bf16.msra.mxu0 0
    %161 = vmatprep.subr.bf16.mxu0 0
    %162 = vmatpush1.bf16.msra.mxu0 0
    %163 = vmatprep.subr.bf16.mxu0 0
    %164 = vmatpush1.bf16.msra.mxu0 0
    %165 = vmatprep.subr.bf16.mxu0 0
    %166 = vmatpush1.bf16.msra.mxu0 0
    %167 = vmatprep.subr.bf16.mxu0 0
    %168 = vmatpush1.bf16.msra.mxu0 0
    %169 = vmatprep.subr.bf16.mxu0 0
    %170 = vmatpush1.bf16.msra.mxu0 0
    %171 = vmatprep.mubr.bf16.mxu0 0
    %172 = vmatmul.mubr.bf16.gmra.mrb[0].mxu0 %v84
    %v173 = vpop.f32.mrb[0].mxu0
    %v174 = vadd.f32 %v89, %v173
    %v175 = vpop.f32.mrb[0].mxu0
    %v176 = vpop.f32.mrb[0].mxu0
    %v177 = vpop.f32.mrb[0].mxu0
    %178 = vdwg.mxu0
    %vm179 = vcmp.gt.f32.partialorder %v174, 0.0
    %v180 = vstv %s65
    %v181 = vmul.f32 %v180, %v174
    %v182 = vsel %vm179, %v174, %v181
    %s183 = scalar_lea.vmem [#allocation6], 64
    %v184 = vld [vmem:[%s183] sm:$0xf]
    %v185 = vld [vmem:[%s183 + $0x4] sm:$0xf]
    %v186 = vld [vmem:[%s183 + $0x8] sm:$0xf]
    %v187 = vld [vmem:[%s183 + $0xc] sm:$0xf]
    %v188 = vld [vmem:[%s183 + $0x10] sm:$0xf]
    %v189 = vld [vmem:[%s183 + $0x14] sm:$0xf]
    %v190 = vld [vmem:[%s183 + $0x18] sm:$0xf]
    %v191 = vld [vmem:[%s183 + $0x1c] sm:$0xf]
    %v192 = vld [vmem:[%s183 + $0x20] sm:$0xf]
    %v193 = vld [vmem:[%s183 + $0x24] sm:$0xf]
    %v194 = vld [vmem:[%s183 + $0x28] sm:$0xf]
    %v195 = vld [vmem:[%s183 + $0x2c] sm:$0xf]
    %v196 = vld [vmem:[%s183 + $0x30] sm:$0xf]
    %v197 = vld [vmem:[%s183 + $0x34] sm:$0xf]
    %v198 = vld [vmem:[%s183 + $0x38] sm:$0xf]
    %v199 = vld [vmem:[%s183 + $0x3c] sm:$0xf]
    %s200 = scalar_lea.vmem %s2, 1
    %v201 = vld [vmem:[%s200] sm:$0x1]
    %v202 = vpack.c.bf16 %v182, %v182
    %v204 = vlaneseq
    %v205 = vshrl.u32 %v204, 7
    %v206 = vsub.s32 0, %v205
    %v207 = vrot.slane %v201, %v206
    %v225 = vunpack.c.l.b16 %v184
    %v226 = vunpack.c.l.b16 %v185
    %v227 = vunpack.c.l.b16 %v186
    %v228 = vunpack.c.l.b16 %v187
    %v229 = vunpack.c.l.b16 %v188
    %v230 = vunpack.c.l.b16 %v189
    %v231 = vunpack.c.l.b16 %v190
    %v232 = vunpack.c.l.b16 %v191
    %v233 = vunpack.c.l.b16 %v192
    %v234 = vunpack.c.l.b16 %v193
    %v235 = vunpack.c.l.b16 %v194
    %v236 = vunpack.c.l.b16 %v195
    %v237 = vunpack.c.l.b16 %v196
    %v238 = vunpack.c.l.b16 %v197
    %v239 = vunpack.c.l.b16 %v198
    %v240 = vunpack.c.l.b16 %v199
    %v241 = vpack.c.b16 %v226, %v225
    %v242 = vpack.c.b16 %v228, %v227
    %v243 = vpack.c.b16 %v230, %v229
    %v244 = vpack.c.b16 %v232, %v231
    %v245 = vpack.c.b16 %v234, %v233
    %v246 = vpack.c.b16 %v236, %v235
    %v247 = vpack.c.b16 %v238, %v237
    %v248 = vpack.c.b16 %v240, %v239
    %257 = vmatprep.subr.bf16.mxu0 0
    %258 = vmatpush1.bf16.msra.mxu0 %v241
    %259 = vmatprep.subr.bf16.mxu0 0
    %260 = vmatpush1.bf16.msra.mxu0 %v242
    %261 = vmatprep.subr.bf16.mxu0 0
    %262 = vmatpush1.bf16.msra.mxu0 %v243
    %263 = vmatprep.subr.bf16.mxu0 0
    %264 = vmatpush1.bf16.msra.mxu0 %v244
    %265 = vmatprep.subr.bf16.mxu0 0
    %266 = vmatpush1.bf16.msra.mxu0 %v245
    %267 = vmatprep.subr.bf16.mxu0 0
    %268 = vmatpush1.bf16.msra.mxu0 %v246
    %269 = vmatprep.subr.bf16.mxu0 0
    %270 = vmatpush1.bf16.msra.mxu0 %v247
    %271 = vmatprep.subr.bf16.mxu0 0
    %272 = vmatpush1.bf16.msra.mxu0 %v248
    %273 = vmatprep.subr.bf16.mxu0 0
    %274 = vmatpush1.bf16.msra.mxu0 0
    %275 = vmatprep.subr.bf16.mxu0 0
    %276 = vmatpush1.bf16.msra.mxu0 0
    %277 = vmatprep.subr.bf16.mxu0 0
    %278 = vmatpush1.bf16.msra.mxu0 0
    %279 = vmatprep.subr.bf16.mxu0 0
    %280 = vmatpush1.bf16.msra.mxu0 0
    %281 = vmatprep.subr.bf16.mxu0 0
    %282 = vmatpush1.bf16.msra.mxu0 0
    %283 = vmatprep.subr.bf16.mxu0 0
    %284 = vmatpush1.bf16.msra.mxu0 0
    %285 = vmatprep.subr.bf16.mxu0 0
    %286 = vmatpush1.bf16.msra.mxu0 0
    %287 = vmatprep.subr.bf16.mxu0 0
    %288 = vmatpush1.bf16.msra.mxu0 0
    %289 = vmatprep.mubr.bf16.mxu0 0
    %290 = vmatmul.mubr.bf16.gmra.mrb[0].mxu0 %v202
    %v291 = vpop.f32.mrb[0].mxu0
    %v292 = vadd.f32 %v207, %v291
    %v293 = vpop.f32.mrb[0].mxu0
    %v294 = vpop.f32.mrb[0].mxu0
    %v295 = vpop.f32.mrb[0].mxu0
    %296 = vdwg.mxu0
    %vm297 = vcmp.gt.f32.partialorder %v292, 0.0
    %v298 = vmul.f32 %v180, %v292
    %v299 = vsel %vm297, %v292, %v298
    %v300 = vpack.c.bf16 %v299, %v299
    %v301 = vld [vmem:[#allocation8] sm:$0xf]
    %v302 = vld [vmem:[#allocation8 + $0x4] sm:$0xf]
    %v303 = vld [vmem:[#allocation8 + $0x8] sm:$0xf]
    %v304 = vld [vmem:[#allocation8 + $0xc] sm:$0xf]
    %v305 = vld [vmem:[#allocation8 + $0x10] sm:$0xf]
    %v306 = vld [vmem:[#allocation8 + $0x14] sm:$0xf]
    %v307 = vld [vmem:[#allocation8 + $0x18] sm:$0xf]
    %v308 = vld [vmem:[#allocation8 + $0x1c] sm:$0xf]
    %v309 = vld [vmem:[#allocation8 + $0x20] sm:$0xf]
    %v310 = vld [vmem:[#allocation8 + $0x24] sm:$0xf]
    %v311 = vld [vmem:[#allocation8 + $0x28] sm:$0xf]
    %v312 = vld [vmem:[#allocation8 + $0x2c] sm:$0xf]
    %v313 = vld [vmem:[#allocation8 + $0x30] sm:$0xf]
    %v314 = vld [vmem:[#allocation8 + $0x34] sm:$0xf]
    %v315 = vld [vmem:[#allocation8 + $0x38] sm:$0xf]
    %v316 = vld [vmem:[#allocation8 + $0x3c] sm:$0xf]
    %v317 = vld [vmem:[%s4] sm:$0x1]
    %v319 = vlaneseq
    %v320 = vshrl.u32 %v319, 7
    %v321 = vsub.s32 0, %v320
    %v322 = vrot.slane %v317, %v321
    %v340 = vunpack.c.l.b16 %v301
    %v341 = vunpack.c.l.b16 %v302
    %v342 = vunpack.c.l.b16 %v303
    %v343 = vunpack.c.l.b16 %v304
    %v344 = vunpack.c.l.b16 %v305
    %v345 = vunpack.c.l.b16 %v306
    %v346 = vunpack.c.l.b16 %v307
    %v347 = vunpack.c.l.b16 %v308
    %v348 = vunpack.c.l.b16 %v309
    %v349 = vunpack.c.l.b16 %v310
    %v350 = vunpack.c.l.b16 %v311
    %v351 = vunpack.c.l.b16 %v312
    %v352 = vunpack.c.l.b16 %v313
    %v353 = vunpack.c.l.b16 %v314
    %v354 = vunpack.c.l.b16 %v315
    %v355 = vunpack.c.l.b16 %v316
    %v356 = vpack.c.b16 %v341, %v340
    %v357 = vpack.c.b16 %v343, %v342
    %v358 = vpack.c.b16 %v345, %v344
    %v359 = vpack.c.b16 %v347, %v346
    %v360 = vpack.c.b16 %v349, %v348
    %v361 = vpack.c.b16 %v351, %v350
    %v362 = vpack.c.b16 %v353, %v352
    %v363 = vpack.c.b16 %v355, %v354
    %372 = vmatprep.subr.bf16.mxu0 0
    %373 = vmatpush1.bf16.msra.mxu0 %v356
    %374 = vmatprep.subr.bf16.mxu0 0
    %375 = vmatpush1.bf16.msra.mxu0 %v357
    %376 = vmatprep.subr.bf16.mxu0 0
    %377 = vmatpush1.bf16.msra.mxu0 %v358
    %378 = vmatprep.subr.bf16.mxu0 0
    %379 = vmatpush1.bf16.msra.mxu0 %v359
    %380 = vmatprep.subr.bf16.mxu0 0
    %381 = vmatpush1.bf16.msra.mxu0 %v360
    %382 = vmatprep.subr.bf16.mxu0 0
    %383 = vmatpush1.bf16.msra.mxu0 %v361
    %384 = vmatprep.subr.bf16.mxu0 0
    %385 = vmatpush1.bf16.msra.mxu0 %v362
    %386 = vmatprep.subr.bf16.mxu0 0
    %387 = vmatpush1.bf16.msra.mxu0 %v363
    %388 = vmatprep.subr.bf16.mxu0 0
    %389 = vmatpush1.bf16.msra.mxu0 0
    %390 = vmatprep.subr.bf16.mxu0 0
    %391 = vmatpush1.bf16.msra.mxu0 0
    %392 = vmatprep.subr.bf16.mxu0 0
    %393 = vmatpush1.bf16.msra.mxu0 0
    %394 = vmatprep.subr.bf16.mxu0 0
    %395 = vmatpush1.bf16.msra.mxu0 0
    %396 = vmatprep.subr.bf16.mxu0 0
    %397 = vmatpush1.bf16.msra.mxu0 0
    %398 = vmatprep.subr.bf16.mxu0 0
    %399 = vmatpush1.bf16.msra.mxu0 0
    %400 = vmatprep.subr.bf16.mxu0 0
    %401 = vmatpush1.bf16.msra.mxu0 0
    %402 = vmatprep.subr.bf16.mxu0 0
    %403 = vmatpush1.bf16.msra.mxu0 0
    %404 = vmatprep.mubr.bf16.mxu0 0
    %405 = vmatmul.mubr.bf16.gmra.mrb[0].mxu0 %v300
    %v406 = vpop.f32.mrb[0].mxu0
    %v407 = vadd.f32 %v322, %v406
    %v408 = vpop.f32.mrb[0].mxu0
    %v409 = vpop.f32.mrb[0].mxu0
    %v410 = vpop.f32.mrb[0].mxu0
    %411 = vdwg.mxu0
    %412 = vmax.xlane.f32.xlu0 %v407
    %v413 = vpop.xlane.xlu0 %412
    %v414 = vsub.f32 %v407, %v413
    %v415 = vmul.f32 %v414, 1.442695
    %v416 = vpow.pop %v415
    %417 = vadd.xlane.f32.xlu0 %v416
    %v418 = vpop.xlane.xlu0 %417
    %v419 = vlog2.pop %v418
    %v420 = vmul.f32 %v419, 0.6931472
    %v421 = vsub.f32 %v414, %v420
    %422 = vst [vmem:[#allocation9] sm:$0xff] %v421
    // Predicated region
    $region38: #{tpu_custom_call.1} parent=1 // pred_check
      _
    $region39: #{tpu_custom_call.1} parent=1 // pred_check_branch
      %424 = sbr.rel (0) target = $region41
    $region40: #{tpu_custom_call.1} parent=1 // pred_region
      %s426 = ssub.s32 128, 128
      %427 = vsyncadd [#allocation5], %s426
      %s429 = sshll.u32 [#allocation9], 4
      %s430 = int_to_ptr.vmem [resolvable:$true] %s429
      %432 = dma.vmem_to_hbm [thread:$0]  %s430, 128, %s6, [#allocation5]
    $region41: #{tpu_custom_call.1} parent=1 // pred_fallthru
      _
    // Predicated region
    $region42: #{tpu_custom_call.1} parent=1 // pred_check
      _
    $region43: #{tpu_custom_call.1} parent=1 // pred_check_branch
      %434 = sbr.rel (0) target = $region45
    $region44: #{tpu_custom_call.1} parent=1 // pred_region
      %435 = dma.done [#allocation5], 128
    $region45: #{tpu_custom_call.1} parent=1 // pred_fallthru
      _
    %436 = vsyncpa [#allocation4], 1
    %437 = vsyncpa [#allocation7], 1
    %438 = vsyncpa [#allocation5], 1

</llo_original>
